<compile_context>
chip_gen: v7x
topology: tpu7x:2x2x1
jax: 0.10.0
libtpu: 0.0.40
codegen_flags: <defaults>
</compile_context>

<pallas_src>
import functools

import jax
import jax.numpy as jnp
from jax.experimental import pallas as pl
from jax.experimental.pallas import tpu as pltpu


def _layernorm_kernel(x_ref, gamma_ref, beta_ref, o_ref, *, eps, inv_nm1):
    x = x_ref[...].astype(jnp.float32)          # (tile_rows, F)
    gamma = gamma_ref[...].astype(jnp.float32)  # (1, F) -- no-op cast if already f32
    beta = beta_ref[...].astype(jnp.float32)    # (1, F)

    mean = jnp.mean(x, axis=-1, keepdims=True)
    centered = x - mean
    # torch.Tensor.std uses the unbiased estimator (divide by N-1).
    var_unbiased = jnp.sum(centered * centered, axis=-1, keepdims=True) * inv_nm1
    std = jnp.sqrt(var_unbiased)
    # Divide only on the (tile_rows, 1) column; the (tile_rows, F) body is mul/add.
    inv = 1.0 / (std + eps)
    out = (centered * inv) * gamma + beta
    o_ref[...] = out.astype(o_ref.dtype)


def _pick_tile_rows(rows, features, itemsize,
                    vmem_budget_bytes=20 * 1024 * 1024, max_tile=1024):
    """Largest row tile that keeps double-buffered in/out slabs + f32 temps in budget."""
    # 2x double-buffered input + 2x double-buffered output (itemsize each)
    # + ~3 f32-sized working copies inside the kernel.
    per_row = features * (4 * itemsize + 12)
    t = max(int(vmem_budget_bytes // per_row), 1)
    t = min(t, max_tile)
    if rows <= t:
        return rows  # single block covering all rows (full-dim block is always legal)
    # sublane-packing friendly multiple: 8 for f32, 16 for bf16, 32 for 1-byte dtypes
    mult = max(8, 32 // itemsize)
    return max(mult, (t // mult) * mult)


def layer_norm(x, gamma, beta, eps=1e-6, tile_rows=None):
    """LayerNorm over the last axis of x, PyTorch module semantics (unbiased std)."""
    orig_shape = x.shape
    features = orig_shape[-1]
    x2d = x.reshape(-1, features)
    rows = x2d.shape[0]

    itemsize = jnp.dtype(x.dtype).itemsize
    if tile_rows is None:
        tile_rows = _pick_tile_rows(rows, features, itemsize)

    gamma2d = gamma.reshape(1, features)
    beta2d = beta.reshape(1, features)

    # features == 1 gives NaN in torch (0/0); propagate the same way.
    inv_nm1 = (1.0 / (features - 1)) if features > 1 else float("nan")

    grid = (pl.cdiv(rows, tile_rows),)

    kernel = functools.partial(_layernorm_kernel, eps=float(eps), inv_nm1=inv_nm1)

    out = pl.pallas_call(
        kernel,
        out_shape=jax.ShapeDtypeStruct((rows, features), x.dtype),
        grid_spec=pltpu.PrefetchScalarGridSpec(
            num_scalar_prefetch=0,
            grid=grid,
            in_specs=[
                pl.BlockSpec((tile_rows, features), lambda i: (i, 0)),
                pl.BlockSpec((1, features), lambda i: (0, 0)),
                pl.BlockSpec((1, features), lambda i: (0, 0)),
            ],
            out_specs=pl.BlockSpec((tile_rows, features), lambda i: (i, 0)),
        ),
        compiler_params=pltpu.CompilerParams(
            dimension_semantics=("parallel",),
            vmem_limit_bytes=48 * 1024 * 1024,
        ),
    )(x2d, gamma2d, beta2d)

    return out.reshape(orig_shape)


def _reference(x, gamma, beta, eps):
    features = x.shape[-1]
    mean = jnp.mean(x, axis=-1, keepdims=True)
    std = jnp.sqrt(jnp.sum((x - mean) ** 2, axis=-1, keepdims=True) / (features - 1))
    return gamma * (x - mean) / (std + eps) + beta


if __name__ == "__main__":
    key = jax.random.PRNGKey(0)
    batch, seq, hidden = 2, 8, 32

    x = jax.random.normal(key, (batch, seq, hidden), dtype=jnp.float32)
    # deterministic parameter init, matching nn.Parameter(torch.ones/zeros(features))
    gamma = jnp.ones((hidden,), dtype=jnp.float32)
    beta = jnp.zeros((hidden,), dtype=jnp.float32)

    out = layer_norm(x, gamma, beta, eps=1e-6)
    out = jax.block_until_ready(out)
    ref = _reference(x, gamma, beta, 1e-6)
    assert jnp.allclose(out, ref, atol=1e-5, rtol=1e-5), "mismatch vs reference"

    # exercise the ragged (non-divisible) grid path: 20 rows with 8-row tiles.
    key2 = jax.random.PRNGKey(1)
    x2 = jax.random.normal(key2, (20, hidden), dtype=jnp.float32)
    out2 = jax.block_until_ready(layer_norm(x2, gamma, beta, eps=1e-6, tile_rows=8))
    ref2 = _reference(x2, gamma, beta, 1e-6)
    assert jnp.allclose(out2, ref2, atol=1e-5, rtol=1e-5), "mismatch vs reference (ragged)"

    print("KERNEL_OK")
</pallas_src>

<mosaic_0001>
module attributes {stable_mosaic.version = 11 : i64} {
  func.func @_layernorm_kernel(%arg0: i32, %arg1: memref<16x32xf32, #tpu.memory_space<vmem>>, %arg2: memref<1x32xf32, #tpu.memory_space<vmem>>, %arg3: memref<1x32xf32, #tpu.memory_space<vmem>>, %arg4: memref<16x32xf32, #tpu.memory_space<vmem>>) attributes {dimension_semantics = [#tpu.dimension_semantics<parallel>], iteration_bounds = array<i64: 1>, scalar_prefetch = 0 : i64, scratch_operands = 0 : i64, tpu.core_type = #tpu.core_type<tc>, window_params = [{transform_indices = @transform_0, window_bounds = array<i64: 16, 32>}, {pipeline_mode = #tpu.pipeline_mode<synchronous>, transform_indices = @transform_1, window_bounds = array<i64: 1, 32>}, {pipeline_mode = #tpu.pipeline_mode<synchronous>, transform_indices = @transform_2, window_bounds = array<i64: 1, 32>}, {transform_indices = @transform_3, window_bounds = array<i64: 16, 32>}]} {
    %c0 = arith.constant 0 : index
    %c0_0 = arith.constant 0 : index
    %0 = vector.load %arg1[%c0, %c0_0] : memref<16x32xf32, #tpu.memory_space<vmem>>, vector<16x32xf32>
    %c0_1 = arith.constant 0 : index
    %c0_2 = arith.constant 0 : index
    %1 = vector.load %arg2[%c0_1, %c0_2] : memref<1x32xf32, #tpu.memory_space<vmem>>, vector<1x32xf32>
    %c0_3 = arith.constant 0 : index
    %c0_4 = arith.constant 0 : index
    %2 = vector.load %arg3[%c0_3, %c0_4] : memref<1x32xf32, #tpu.memory_space<vmem>>, vector<1x32xf32>
    %cst = arith.constant dense<0.000000e+00> : vector<16xf32>
    %3 = vector.multi_reduction <add>, %0, %cst [1] : vector<16x32xf32> to vector<16xf32>
    %4 = vector.shape_cast %3 : vector<16xf32> to vector<16x1xf32>
    %cst_5 = arith.constant 3.200000e+01 : f32
    %5 = vector.broadcast %cst_5 : f32 to vector<16x1xf32>
    %6 = arith.divf %4, %5 : vector<16x1xf32>
    %7 = vector.broadcast %6 : vector<16x1xf32> to vector<16x32xf32>
    %8 = arith.subf %0, %7 : vector<16x32xf32>
    %9 = arith.mulf %8, %8 : vector<16x32xf32>
    %cst_6 = arith.constant dense<0.000000e+00> : vector<16xf32>
    %10 = vector.multi_reduction <add>, %9, %cst_6 [1] : vector<16x32xf32> to vector<16xf32>
    %11 = vector.shape_cast %10 : vector<16xf32> to vector<16x1xf32>
    %cst_7 = arith.constant 0.0322580636 : f32
    %12 = vector.broadcast %cst_7 : f32 to vector<16x1xf32>
    %13 = arith.mulf %11, %12 : vector<16x1xf32>
    %14 = math.sqrt %13 : vector<16x1xf32>
    %cst_8 = arith.constant 9.99999997E-7 : f32
    %15 = vector.broadcast %cst_8 : f32 to vector<16x1xf32>
    %16 = arith.addf %14, %15 : vector<16x1xf32>
    %cst_9 = arith.constant 1.000000e+00 : f32
    %17 = vector.broadcast %cst_9 : f32 to vector<16x1xf32>
    %18 = arith.divf %17, %16 : vector<16x1xf32>
    %19 = vector.broadcast %18 : vector<16x1xf32> to vector<16x32xf32>
    %20 = arith.mulf %8, %19 : vector<16x32xf32>
    %21 = vector.broadcast %1 : vector<1x32xf32> to vector<16x32xf32>
    %22 = arith.mulf %20, %21 : vector<16x32xf32>
    %23 = vector.broadcast %2 : vector<1x32xf32> to vector<16x32xf32>
    %24 = arith.addf %22, %23 : vector<16x32xf32>
    %c0_10 = arith.constant 0 : index
    %c0_11 = arith.constant 0 : index
    %25 = vector.load %arg4[%c0_10, %c0_11] : memref<16x32xf32, #tpu.memory_space<vmem>>, vector<16x32xf32>
    tpu.vector_store %arg4[%c0_10, %c0_11], %24 {strides = array<i32>} : memref<16x32xf32, #tpu.memory_space<vmem>>, vector<16x32xf32>,
    return
  }
  func.func @transform_0(%arg0: i32) -> (i32, i32) {
    %c0_i32 = arith.constant 0 : i32
    %c0_i32_0 = arith.constant 0 : i32
    return %arg0, %c0_i32 : i32, i32
  }
  func.func @transform_1(%arg0: i32) -> (i32, i32) {
    %c0_i32 = arith.constant 0 : i32
    %c0_i32_0 = arith.constant 0 : i32
    %c0_i32_1 = arith.constant 0 : i32
    return %c0_i32, %c0_i32_0 : i32, i32
  }
  func.func @transform_2(%arg0: i32) -> (i32, i32) {
    %c0_i32 = arith.constant 0 : i32
    %c0_i32_0 = arith.constant 0 : i32
    %c0_i32_1 = arith.constant 0 : i32
    return %c0_i32, %c0_i32_0 : i32, i32
  }
  func.func @transform_3(%arg0: i32) -> (i32, i32) {
    %c0_i32 = arith.constant 0 : i32
    %c0_i32_0 = arith.constant 0 : i32
    return %arg0, %c0_i32 : i32, i32
  }
}

</mosaic_0001>

<llo_original>
// kernel: tpu_custom_call.1
$region0: #{tpu_custom_call.1}
  #allocation0 [shape = 'u32[]', space=smem, size = 0x4, offset = 0x4, fixed_abs, tag = 'smem constant byte address 0x4 - core index']
  #allocation1 [shape = 'u32[144,128]{1,0:T(1,128)}', space=vmem, size = 0x12000, scoped, tag = 'internal scratch']
  %s0 = inlined_call_operand.hbm [shape: f32[16,32], index: 0, kind: input, shape index: {}]
  %s1 = inlined_call_operand.vmem [shape: f32[1,32], index: 1, kind: input, shape index: {}]
  %s2 = inlined_call_operand.vmem [shape: f32[1,32], index: 2, kind: input, shape index: {}]
  %s3 = inlined_call_operand.hbm [shape: f32[16,32], index: 3, kind: output, shape index: {}]
  %s4 = sld [smem:[#allocation0]]
  $region26: #{tpu_custom_call.1} parent=0
    _
  %s6 = ssub.s32 1, %s4
  %s7 = scalar_select 0, %s6, %s4
  $region1: #{tpu_custom_call.1} parent=0
    #allocation2 [shape = 'u8[8192]{0}', space=vmem, size = 0x2000, scoped, tag = 'input window, operand 0, single buffered']
    #allocation3 [shape = 's32[1]{0}', space=sflag, size = 0x4, scoped, tag = 'scoped memory for tpu_custom_call.1']
    #allocation4 [shape = 's32[1]{0}', space=sflag, size = 0x4, scoped, tag = 'scoped memory for tpu_custom_call.1']
    #allocation5 [shape = 'u8[8192]{0}', space=vmem, size = 0x2000, scoped, tag = 'output window, operand 0, single buffered']
    %8 = vsyncpa [#allocation3], 0
    %9 = vsyncpa [#allocation4], 0
    // Predicated region
    $region2: #{tpu_custom_call.1} parent=1 // pred_check
      _
    $region3: #{tpu_custom_call.1} parent=1 // pred_check_branch
      %11 = sbr.rel (0) target = $region5
    $region4: #{tpu_custom_call.1} parent=1 // pred_region
      %s13 = ssub.s32 256, 256
      %14 = vsyncadd [#allocation3], %s13
      %s15 = sshll.u32 [#allocation2], 4
      %s16 = int_to_ptr.vmem [resolvable:$true] %s15
      %21 = dma.hbm_to_vmem [thread:$0]  %s0, 256, %s16, [#allocation3], 128, 128, 8
    $region5: #{tpu_custom_call.1} parent=1 // pred_fallthru
      _
    // Predicated region
    $region6: #{tpu_custom_call.1} parent=1 // pred_check
      _
    $region7: #{tpu_custom_call.1} parent=1 // pred_check_branch
      %23 = sbr.rel (0) target = $region9
    $region8: #{tpu_custom_call.1} parent=1 // pred_region
      _
    $region9: #{tpu_custom_call.1} parent=1 // pred_fallthru
      _
    // Predicated region
    $region10: #{tpu_custom_call.1} parent=1 // pred_check
      _
    $region11: #{tpu_custom_call.1} parent=1 // pred_check_branch
      %25 = sbr.rel (0) target = $region13
    $region12: #{tpu_custom_call.1} parent=1 // pred_region
      _
    $region13: #{tpu_custom_call.1} parent=1 // pred_fallthru
      _
    // Predicated region
    $region14: #{tpu_custom_call.1} parent=1 // pred_check
      _
    $region15: #{tpu_custom_call.1} parent=1 // pred_check_branch
      %27 = sbr.rel (0) target = $region17
    $region16: #{tpu_custom_call.1} parent=1 // pred_region
      %28 = dma.done [#allocation3], 256
    $region17: #{tpu_custom_call.1} parent=1 // pred_fallthru
      _
    %v29 = vld [vmem:[#allocation2] sm:$0xff]
    %v30 = vld [vmem:[#allocation2 + $0x8] sm:$0xff]
    %v31 = vld [vmem:[%s1] sm:$0x1]
    %v32 = vld [vmem:[%s2] sm:$0x1]
    %vm33 = vcmask 261120
    %v34 = vsel %vm33, %v29, 0.0
    %35 = vadd.xlane.f32.xlu0 %v34
    %v36 = vpop.xlane.xlu0 %35
    %v37 = vsel %vm33, %v30, 0.0
    %38 = vadd.xlane.f32.xlu0 %v37
    %v39 = vpop.xlane.xlu0 %38
    %v40 = vrcp.pop 32.0
    %v41 = vmul.f32 %v36, %v40
    %v42 = vmul.f32 %v39, %v40
    %v43 = vsub.f32 %v29, %v41
    %v44 = vsub.f32 %v30, %v42
    %v45 = vmul.f32 %v43, %v43
    %v46 = vmul.f32 %v44, %v44
    %v47 = vsel %vm33, %v45, 0.0
    %48 = vadd.xlane.f32.xlu0 %v47
    %v49 = vpop.xlane.xlu0 %48
    %v50 = vsel %vm33, %v46, 0.0
    %51 = vadd.xlane.f32.xlu0 %v50
    %v52 = vpop.xlane.xlu0 %51
    %v53 = vmul.f32 %v49, 0.032258064
    %v54 = vmul.f32 %v52, 0.032258064
    %v55 = vrsqrt.pop %v53
    %v56 = vmul.f32 %v53, %v55
    %vm57 = vcmp.eq.f32.partialorder %v53, inf
    %v58 = vsel %vm57, %v53, %v56
    %vm59 = vcmp.eq.f32.partialorder %v53, 0.0
    %v60 = vand.u32 %v53, 2147483648
    %v61 = vsel %vm59, %v60, %v58
    %v62 = vrsqrt.pop %v54
    %v63 = vmul.f32 %v54, %v62
    %vm64 = vcmp.eq.f32.partialorder %v54, inf
    %v65 = vsel %vm64, %v54, %v63
    %vm66 = vcmp.eq.f32.partialorder %v54, 0.0
    %v67 = vand.u32 %v54, 2147483648
    %v68 = vsel %vm66, %v67, %v65
    %v69 = vadd.f32 %v61, 1e-06
    %v70 = vadd.f32 %v68, 1e-06
    %v71 = vrcp.pop %v69
    %v72 = vmul.f32 1.0, %v71
    %v73 = vrcp.pop %v70
    %v74 = vmul.f32 1.0, %v73
    %v75 = vmul.f32 %v43, %v72
    %v76 = vmul.f32 %v44, %v74
    %v78 = vlaneseq
    %v79 = vshrl.u32 %v78, 7
    %v80 = vsub.s32 0, %v79
    %v81 = vrot.slane %v31, %v80
    %v83 = vmul.f32 %v75, %v81
    %v84 = vmul.f32 %v76, %v81
    %v86 = vlaneseq
    %v87 = vshrl.u32 %v86, 7
    %v88 = vsub.s32 0, %v87
    %v89 = vrot.slane %v32, %v88
    %v91 = vadd.f32 %v83, %v89
    %v92 = vadd.f32 %v84, %v89
    %93 = vst.msk [vmem:[#allocation5] sm:$0xff] %vm33, %v91
    %94 = vst.msk [vmem:[#allocation5 + $0x8] sm:$0xff] %vm33, %v92
    // Predicated region
    $region18: #{tpu_custom_call.1} parent=1 // pred_check
      _
    $region19: #{tpu_custom_call.1} parent=1 // pred_check_branch
      %96 = sbr.rel (0) target = $region21
    $region20: #{tpu_custom_call.1} parent=1 // pred_region
      %s98 = ssub.s32 256, 256
      %99 = vsyncadd [#allocation4], %s98
      %s100 = sshll.u32 [#allocation5], 4
      %s101 = int_to_ptr.vmem [resolvable:$true] %s100
      %106 = dma.vmem_to_hbm [thread:$0]  %s101, 256, %s3, [#allocation4], 128, 128, 8
    $region21: #{tpu_custom_call.1} parent=1 // pred_fallthru
      _
    // Predicated region
    $region22: #{tpu_custom_call.1} parent=1 // pred_check
      _
    $region23: #{tpu_custom_call.1} parent=1 // pred_check_branch
      %108 = sbr.rel (0) target = $region25
    $region24: #{tpu_custom_call.1} parent=1 // pred_region
      %109 = dma.done [#allocation4], 256
    $region25: #{tpu_custom_call.1} parent=1 // pred_fallthru
      _
    %110 = vsyncpa [#allocation3], 1
    %111 = vsyncpa [#allocation4], 1

</llo_original>
